<compile_context>
chip_gen: v7x
topology: tpu7x:2x2x1
jax: 0.10.0
libtpu: 0.0.40
codegen_flags: <defaults>
</compile_context>

<pallas_src>
import math
import functools

import jax
import jax.numpy as jnp
from jax.experimental import pallas as pl
from jax.experimental.pallas import tpu as pltpu


def _round_up(n, m):
    return ((n + m - 1) // m) * m


def _arcmargin_kernel(x_ref, wnT_ref, label_ref, out_ref, *,
                      s, cos_m, sin_m, th, mm, easy_margin):
    eps = 1e-12  # F.normalize default eps

    x = x_ref[...].astype(jnp.float32)     # [TB, D] (upcast in VMEM if bf16)
    wnT = wnT_ref[...]                      # [D, C]  f32, already L2-normalized
    label = label_ref[...]                  # [TB, 1] int32

    # F.normalize(x, p=2, dim=1) folded into the matmul epilogue:
    #   cosine = (x @ wnT) * rsqrt(max(sum(x^2), eps^2))
    sumsq = jnp.sum(x * x, axis=-1, keepdims=True)          # [TB, 1]
    r = jax.lax.rsqrt(jnp.maximum(sumsq, eps * eps))         # [TB, 1]

    cosine = jnp.dot(x, wnT, preferred_element_type=jnp.float32) * r   # [TB, C]

    # sine = sqrt(max(1 - cos^2, 0));  1 - cos^2 <= 1 so no upper clamp needed.
    sine = jnp.sqrt(jnp.maximum(1.0 - cosine * cosine, 0.0))

    # phi = cos(theta + m)
    phi = cosine * cos_m - sine * sin_m
    if easy_margin:
        phi = jnp.where(cosine > 0.0, phi, cosine)
    else:
        phi = jnp.where(cosine > th, phi, cosine - mm)

    # one-hot blend as a single select (label [TB,1] broadcasts against [TB,C])
    TB, C = cosine.shape
    class_ids = jax.lax.broadcasted_iota(jnp.int32, (TB, C), dimension=1)
    out = jnp.where(class_ids == label, phi, cosine) * s
    out_ref[...] = out.astype(out_ref.dtype)


def _pick_block_b(B, D, C, x_itemsize, *,
                  target_x_bytes=4 << 20,       # ~4 MiB x tile (roofline-sized)
                  vmem_budget=28 << 20):        # safe on v7x's 64 MiB VMEM
    """Pick a batch tile: big enough to amortize per-step overhead (~600 cyc),
    small enough that double-buffered tiles fit the VMEM budget."""
    # double-buffered x + out + label, plus the resident weight
    per_row = 2 * (x_itemsize * D) + 2 * (4 * C) + 2 * 4
    tb_vmem = max(8, (vmem_budget - 4 * C * D) // per_row)
    tb_target = max(8, target_x_bytes // (x_itemsize * D))
    tb = min(int(tb_vmem), int(tb_target))
    tb = max(8, (tb // 8) * 8)                  # multiple of 8 sublanes
    tb = min(tb, _round_up(B, 8))               # never larger than the batch
    return tb


def arc_margin_product(x, weight, label, *, s=30.0, m=0.5, easy_margin=False,
                       block_b=None):
    """x: [B, D] f32/bf16, weight: [C, D] f32, label: [B] int -> [B, C] f32."""
    B, D = x.shape
    C, D2 = weight.shape
    assert D == D2

    eps = 1e-12

    # --- hoisted: normalize the (tiny) weight once and pre-transpose to [D, C]
    w32 = weight.astype(jnp.float32)
    w_sumsq = jnp.sum(w32 * w32, axis=-1, keepdims=True)
    wn = w32 * jax.lax.rsqrt(jnp.maximum(w_sumsq, eps * eps))   # [C, D]
    wnT = wn.T                                                   # [D, C]

    lab2d = label.astype(jnp.int32).reshape(B, 1)

    # --- batch tiling: no wrapper-side padding; ragged last tile is handled by
    #     Pallas bounds-masked block DMA (row math is independent, OOB rows are
    #     never written back).
    TB = block_b if block_b is not None else _pick_block_b(B, D, C, x.dtype.itemsize)
    grid_b = pl.cdiv(B, TB)

    kernel = functools.partial(
        _arcmargin_kernel,
        s=float(s),
        cos_m=math.cos(m),
        sin_m=math.sin(m),
        th=math.cos(math.pi - m),
        mm=math.sin(math.pi - m) * m,
        easy_margin=easy_margin,
    )

    out = pl.pallas_call(
        kernel,
        out_shape=jax.ShapeDtypeStruct((B, C), jnp.float32),
        grid=(grid_b,),
        in_specs=[
            pl.BlockSpec((TB, D), lambda i: (i, 0)),     # x: tiled over batch
            pl.BlockSpec((D, C), lambda i: (0, 0)),      # wnT: resident block (full dims)
            pl.BlockSpec((TB, 1), lambda i: (i, 0)),     # label: tiled over batch
        ],
        out_specs=pl.BlockSpec((TB, C), lambda i: (i, 0)),   # last dim == full C
        compiler_params=pltpu.CompilerParams(
            dimension_semantics=("parallel",),   # shard batch tiles across TCs (v7x)
            vmem_limit_bytes=32 * 1024 * 1024,   # tile budget sized to stay under this
        ),
    )(x, wnT, lab2d)

    return out


def _reference(x, weight, label, *, s=30.0, m=0.5, easy_margin=False):
    """Pure-JAX reference mirroring the PyTorch forward."""
    eps = 1e-12
    x = x.astype(jnp.float32)
    xn = x / jnp.maximum(jnp.linalg.norm(x, axis=1, keepdims=True), eps)
    wn = weight / jnp.maximum(jnp.linalg.norm(weight, axis=1, keepdims=True), eps)
    cosine = xn @ wn.T
    sine = jnp.sqrt(jnp.clip(1.0 - cosine ** 2, 0.0, 1.0))
    phi = cosine * math.cos(m) - sine * math.sin(m)
    if easy_margin:
        phi = jnp.where(cosine > 0.0, phi, cosine)
    else:
        phi = jnp.where(cosine > math.cos(math.pi - m),
                        phi, cosine - math.sin(math.pi - m) * m)
    one_hot = jax.nn.one_hot(label, cosine.shape[1], dtype=jnp.float32)
    return (one_hot * phi + (1.0 - one_hot) * cosine) * s


if __name__ == "__main__":
    # Small shapes consistent with the module: hidden_dim=32, out_features=2.
    B, D, C = 8, 32, 2
    key = jax.random.PRNGKey(0)
    kx, kw, kl = jax.random.split(key, 3)

    x = jax.random.normal(kx, (B, D), dtype=jnp.float32)

    # Deterministic xavier_uniform_ init for weight [C, D]:
    # bound = sqrt(6 / (fan_in + fan_out)) = sqrt(6 / (D + C))
    bound = math.sqrt(6.0 / (D + C))
    weight = jax.random.uniform(kw, (C, D), dtype=jnp.float32,
                                minval=-bound, maxval=bound)

    label = jax.random.randint(kl, (B,), 0, C, dtype=jnp.int32)

    # hard-margin branch
    out = arc_margin_product(x, weight, label, s=30.0, m=0.5, easy_margin=False)
    out = jax.block_until_ready(out)
    ref = _reference(x, weight, label, s=30.0, m=0.5, easy_margin=False)
    assert out.shape == (B, C)
    assert jnp.allclose(out, ref, atol=2e-4, rtol=2e-4), (out, ref)

    # easy-margin branch
    out_e = arc_margin_product(x, weight, label, s=30.0, m=0.5, easy_margin=True)
    out_e = jax.block_until_ready(out_e)
    ref_e = _reference(x, weight, label, s=30.0, m=0.5, easy_margin=True)
    assert jnp.allclose(out_e, ref_e, atol=2e-4, rtol=2e-4), (out_e, ref_e)

    print("KERNEL_OK")
</pallas_src>

<mosaic_0001>
module attributes {stable_mosaic.version = 11 : i64} {
  func.func @_arcmargin_kernel(%arg0: i32, %arg1: memref<8x32xf32, #tpu.memory_space<vmem>>, %arg2: memref<32x2xf32, #tpu.memory_space<vmem>>, %arg3: memref<8x1xi32, #tpu.memory_space<vmem>>, %arg4: memref<8x2xf32, #tpu.memory_space<vmem>>) attributes {dimension_semantics = [#tpu.dimension_semantics<parallel>], iteration_bounds = array<i64: 1>, scalar_prefetch = 0 : i64, scratch_operands = 0 : i64, tpu.core_type = #tpu.core_type<tc>, window_params = [{transform_indices = @transform_0, window_bounds = array<i64: 8, 32>}, {pipeline_mode = #tpu.pipeline_mode<synchronous>, transform_indices = @transform_1, window_bounds = array<i64: 32, 2>}, {transform_indices = @transform_2, window_bounds = array<i64: 8, 1>}, {transform_indices = @transform_3, window_bounds = array<i64: 8, 2>}]} {
    %c0 = arith.constant 0 : index
    %c0_0 = arith.constant 0 : index
    %0 = vector.load %arg1[%c0, %c0_0] : memref<8x32xf32, #tpu.memory_space<vmem>>, vector<8x32xf32>
    %c0_1 = arith.constant 0 : index
    %c0_2 = arith.constant 0 : index
    %1 = vector.load %arg2[%c0_1, %c0_2] : memref<32x2xf32, #tpu.memory_space<vmem>>, vector<32x2xf32>
    %c0_3 = arith.constant 0 : index
    %c0_4 = arith.constant 0 : index
    %2 = vector.load %arg3[%c0_3, %c0_4] : memref<8x1xi32, #tpu.memory_space<vmem>>, vector<8x1xi32>
    %3 = arith.mulf %0, %0 : vector<8x32xf32>
    %cst = arith.constant dense<0.000000e+00> : vector<8xf32>
    %4 = vector.multi_reduction <add>, %3, %cst [1] : vector<8x32xf32> to vector<8xf32>
    %5 = vector.shape_cast %4 : vector<8xf32> to vector<8x1xf32>
    %cst_5 = arith.constant 1.000000e-24 : f32
    %6 = vector.broadcast %cst_5 : f32 to vector<8x1xf32>
    %7 = arith.maximumf %5, %6 : vector<8x1xf32>
    %8 = math.rsqrt %7 : vector<8x1xf32>
    %cst_6 = arith.constant dense<0.000000e+00> : vector<8x2xf32>
    %9 = tpu.matmul %0, %1, %cst_6 {dimension_numbers = #tpu.dot_dimension_numbers<[1], [0], [0], [1], [0, 0, 1, 1], [], []>} : vector<8x32xf32>, vector<32x2xf32>, vector<8x2xf32> -> vector<8x2xf32>
    %10 = vector.broadcast %8 : vector<8x1xf32> to vector<8x2xf32>
    %11 = arith.mulf %9, %10 : vector<8x2xf32>
    %12 = arith.mulf %11, %11 : vector<8x2xf32>
    %cst_7 = arith.constant 1.000000e+00 : f32
    %13 = vector.broadcast %cst_7 : f32 to vector<8x2xf32>
    %14 = arith.subf %13, %12 : vector<8x2xf32>
    %cst_8 = arith.constant 0.000000e+00 : f32
    %15 = vector.broadcast %cst_8 : f32 to vector<8x2xf32>
    %16 = arith.maximumf %14, %15 : vector<8x2xf32>
    %17 = math.sqrt %16 : vector<8x2xf32>
    %cst_9 = arith.constant 0.87758255 : f32
    %18 = vector.broadcast %cst_9 : f32 to vector<8x2xf32>
    %19 = arith.mulf %11, %18 : vector<8x2xf32>
    %cst_10 = arith.constant 0.47942555 : f32
    %20 = vector.broadcast %cst_10 : f32 to vector<8x2xf32>
    %21 = arith.mulf %17, %20 : vector<8x2xf32>
    %22 = arith.subf %19, %21 : vector<8x2xf32>
    %cst_11 = arith.constant -0.87758255 : f32
    %23 = vector.broadcast %cst_11 : f32 to vector<8x2xf32>
    %24 = arith.cmpf ogt, %11, %23 : vector<8x2xf32>
    %cst_12 = arith.constant 0.239712775 : f32
    %25 = vector.broadcast %cst_12 : f32 to vector<8x2xf32>
    %26 = arith.subf %11, %25 : vector<8x2xf32>
    %27 = arith.select %24, %22, %26 : vector<8x2xi1>, vector<8x2xf32>
    %28 = tpu.iota {dimensions = array<i32: 1>} : vector<8x2xi32>
    %29 = vector.broadcast %2 : vector<8x1xi32> to vector<8x2xi32>
    %30 = arith.cmpi eq, %28, %29 : vector<8x2xi32>
    %31 = arith.select %30, %27, %11 : vector<8x2xi1>, vector<8x2xf32>
    %cst_13 = arith.constant 3.000000e+01 : f32
    %32 = vector.broadcast %cst_13 : f32 to vector<8x2xf32>
    %33 = arith.mulf %31, %32 : vector<8x2xf32>
    %c0_14 = arith.constant 0 : index
    %c0_15 = arith.constant 0 : index
    %34 = vector.load %arg4[%c0_14, %c0_15] : memref<8x2xf32, #tpu.memory_space<vmem>>, vector<8x2xf32>
    tpu.vector_store %arg4[%c0_14, %c0_15], %33 {strides = array<i32>} : memref<8x2xf32, #tpu.memory_space<vmem>>, vector<8x2xf32>,
    return
  }
  func.func @transform_0(%arg0: i32) -> (i32, i32) {
    %c0_i32 = arith.constant 0 : i32
    %c0_i32_0 = arith.constant 0 : i32
    return %arg0, %c0_i32 : i32, i32
  }
  func.func @transform_1(%arg0: i32) -> (i32, i32) {
    %c0_i32 = arith.constant 0 : i32
    %c0_i32_0 = arith.constant 0 : i32
    %c0_i32_1 = arith.constant 0 : i32
    return %c0_i32, %c0_i32_0 : i32, i32
  }
  func.func @transform_2(%arg0: i32) -> (i32, i32) {
    %c0_i32 = arith.constant 0 : i32
    %c0_i32_0 = arith.constant 0 : i32
    return %arg0, %c0_i32 : i32, i32
  }
  func.func @transform_3(%arg0: i32) -> (i32, i32) {
    %c0_i32 = arith.constant 0 : i32
    %c0_i32_0 = arith.constant 0 : i32
    return %arg0, %c0_i32 : i32, i32
  }
}

</mosaic_0001>

<llo_original>
// kernel: tpu_custom_call.1
$region0: #{tpu_custom_call.1}
  #allocation0 [shape = 'u32[]', space=smem, size = 0x4, offset = 0x4, fixed_abs, tag = 'smem constant byte address 0x4 - core index']
  #allocation1 [shape = 'u32[144,128]{1,0:T(1,128)}', space=vmem, size = 0x12000, scoped, tag = 'internal scratch']
  %s0 = inlined_call_operand.vmem [shape: f32[8,32], index: 0, kind: input, shape index: {}]
  %s1 = inlined_call_operand.vmem [shape: f32[32,2], index: 1, kind: input, shape index: {}]
  %s2 = inlined_call_operand.vmem [shape: s32[8,1], index: 2, kind: input, shape index: {}]
  %s3 = inlined_call_operand.vmem [shape: f32[8,2], index: 3, kind: output, shape index: {}]
  %s4 = sld [smem:[#allocation0]]
  $region22: #{tpu_custom_call.1} parent=0
    _
  %s6 = ssub.s32 1, %s4
  %s7 = scalar_select 0, %s6, %s4
  // Predicated region
  $region2: #{tpu_custom_call.1} parent=0 // pred_check
    _
  $region3: #{tpu_custom_call.1} parent=0 // pred_check_branch
    %9 = sbr.rel (0) target = $region5
  $region4: #{tpu_custom_call.1} parent=0 // pred_region
    _
  $region5: #{tpu_custom_call.1} parent=0 // pred_fallthru
    _
  // Predicated region
  $region6: #{tpu_custom_call.1} parent=0 // pred_check
    _
  $region7: #{tpu_custom_call.1} parent=0 // pred_check_branch
    %11 = sbr.rel (0) target = $region9
  $region8: #{tpu_custom_call.1} parent=0 // pred_region
    _
  $region9: #{tpu_custom_call.1} parent=0 // pred_fallthru
    _
  // Predicated region
  $region10: #{tpu_custom_call.1} parent=0 // pred_check
    _
  $region11: #{tpu_custom_call.1} parent=0 // pred_check_branch
    %13 = sbr.rel (0) target = $region13
  $region12: #{tpu_custom_call.1} parent=0 // pred_region
    _
  $region13: #{tpu_custom_call.1} parent=0 // pred_fallthru
    _
  %v14 = vld [vmem:[%s0] sm:$0xff]
  %v15 = vld [vmem:[%s1] sm:$0xff]
  %v16 = vld [vmem:[%s1 + $0x8] sm:$0xff]
  %v17 = vld [vmem:[%s1 + $0x10] sm:$0xff]
  %v18 = vld [vmem:[%s1 + $0x18] sm:$0xff]
  %v19 = vld [vmem:[%s2] sm:$0xff]
  %v20 = vmul.f32 %v14, %v14
  %vm21 = vcmask 261120
  %v22 = vsel %vm21, %v20, 0.0
  %23 = vadd.xlane.f32.xlu0 %v22
  %v24 = vpop.xlane.xlu0 %23
  %v25 = vmax.f32 %v24, 1e-24
  %v26 = vrsqrt.pop %v25
  %v28 = vsel %vm21, %v14, 0
  %30 = vmatprep.subr.mxu0 0.0
  %31 = vmatpush1.msra.mxu0 %v15
  %32 = vmatprep.subr.mxu0 0.0
  %33 = vmatpush1.msra.mxu0 %v16
  %34 = vmatprep.subr.mxu0 0.0
  %35 = vmatpush1.msra.mxu0 %v17
  %36 = vmatprep.subr.mxu0 0.0
  %37 = vmatpush1.msra.mxu0 %v18
  %38 = vmatprep.subr.mxu0 0.0
  %39 = vmatpush1.msra.mxu0 0.0
  %40 = vmatprep.subr.mxu0 0.0
  %41 = vmatpush1.msra.mxu0 0.0
  %42 = vmatprep.subr.mxu0 0.0
  %43 = vmatpush1.msra.mxu0 0.0
  %44 = vmatprep.subr.mxu0 0.0
  %45 = vmatpush1.msra.mxu0 0.0
  %46 = vmatprep.subr.mxu0 0.0
  %47 = vmatpush1.msra.mxu0 0.0
  %48 = vmatprep.subr.mxu0 0.0
  %49 = vmatpush1.msra.mxu0 0.0
  %50 = vmatprep.subr.mxu0 0.0
  %51 = vmatpush1.msra.mxu0 0.0
  %52 = vmatprep.subr.mxu0 0.0
  %53 = vmatpush1.msra.mxu0 0.0
  %54 = vmatprep.subr.mxu0 0.0
  %55 = vmatpush1.msra.mxu0 0.0
  %56 = vmatprep.subr.mxu0 0.0
  %57 = vmatpush1.msra.mxu0 0.0
  %58 = vmatprep.subr.mxu0 0.0
  %59 = vmatpush1.msra.mxu0 0.0
  %60 = vmatprep.subr.mxu0 0.0
  %61 = vmatpush1.msra.mxu0 0.0
  %62 = vmatprep.subr.mxu0 0.0
  %63 = vmatpush1.msra.mxu0 0.0
  %64 = vmatprep.subr.mxu0 0.0
  %65 = vmatpush1.msra.mxu0 0.0
  %66 = vmatprep.subr.mxu0 0.0
  %67 = vmatpush1.msra.mxu0 0.0
  %68 = vmatprep.subr.mxu0 0.0
  %69 = vmatpush1.msra.mxu0 0.0
  %70 = vmatprep.subr.mxu0 0.0
  %71 = vmatpush1.msra.mxu0 0.0
  %72 = vmatprep.subr.mxu0 0.0
  %73 = vmatpush1.msra.mxu0 0.0
  %74 = vmatprep.subr.mxu0 0.0
  %75 = vmatpush1.msra.mxu0 0.0
  %76 = vmatprep.subr.mxu0 0.0
  %77 = vmatpush1.msra.mxu0 0.0
  %78 = vmatprep.subr.mxu0 0.0
  %79 = vmatpush1.msra.mxu0 0.0
  %80 = vmatprep.subr.mxu0 0.0
  %81 = vmatpush1.msra.mxu0 0.0
  %82 = vmatprep.subr.mxu0 0.0
  %83 = vmatpush1.msra.mxu0 0.0
  %84 = vmatprep.subr.mxu0 0.0
  %85 = vmatpush1.msra.mxu0 0.0
  %86 = vmatprep.subr.mxu0 0.0
  %87 = vmatpush1.msra.mxu0 0.0
  %88 = vmatprep.subr.mxu0 0.0
  %89 = vmatpush1.msra.mxu0 0.0
  %90 = vmatprep.subr.mxu0 0.0
  %91 = vmatpush1.msra.mxu0 0.0
  %92 = vmatprep.subr.mxu0 0.0
  %93 = vmatpush1.msra.mxu0 0.0
  %94 = vmatprep.mubr.f32.mxu0 0.0
  %95 = vmatmul.mubr.f32.gmra.mrb[0].mxu0 %v28
  %v96 = vpop.f32.mrb[0].mxu0
  %v97 = vadd.f32 0.0, %v96
  %v98 = vpop.f32.mrb[0].mxu0
  %99 = vdwg.mxu0
  %v100 = vmul.f32 %v97, %v26
  %v101 = vmul.f32 %v100, %v100
  %v102 = vsub.f32 1.0, %v101
  %v103 = vmax.f32 %v102, 0.0
  %v104 = vrsqrt.pop %v103
  %v105 = vmul.f32 %v103, %v104
  %vm106 = vcmp.eq.f32.partialorder %v103, inf
  %v107 = vsel %vm106, %v103, %v105
  %vm108 = vcmp.eq.f32.partialorder %v103, 0.0
  %v109 = vand.u32 %v103, 2147483648
  %v110 = vsel %vm108, %v109, %v107
  %v111 = vmul.f32 %v100, 0.87758255
  %v112 = vmul.f32 %v110, 0.47942555
  %v113 = vsub.f32 %v111, %v112
  %vm114 = vcmp.gt.f32.partialorder %v100, -0.87758255
  %v115 = vsub.f32 %v100, 0.23971277
  %v116 = vsel %vm114, %v113, %v115
  %v117 = vlaneseq
  %v118 = vand.u32 %v117, 127
  %119 = vset.pattern.permute.xlu0 0
  %120 = vperm.xlu0 %119, %v19
  %v121 = vpop.permute.xlu0 %120
  %vm122 = vcmp.eq.s32.totalorder %v118, %v121
  %v123 = vsel %vm122, %v116, %v100
  %v124 = vmul.f32 %v123, 30.0
  %vm125 = vcmask 15360
  %126 = vst.msk [vmem:[%s3] sm:$0xff] %vm125, %v124
  // Predicated region
  $region14: #{tpu_custom_call.1} parent=0 // pred_check
    _
  $region15: #{tpu_custom_call.1} parent=0 // pred_check_branch
    %128 = sbr.rel (0) target = $region17
  $region16: #{tpu_custom_call.1} parent=0 // pred_region
    _
  $region17: #{tpu_custom_call.1} parent=0 // pred_fallthru
    _
  // Predicated region
  $region18: #{tpu_custom_call.1} parent=0 // pred_check
    _
  $region19: #{tpu_custom_call.1} parent=0 // pred_check_branch
    %130 = sbr.rel (0) target = $region21
  $region20: #{tpu_custom_call.1} parent=0 // pred_region
    _
  $region21: #{tpu_custom_call.1} parent=0 // pred_fallthru
    _

</llo_original>
